<compile_context>
chip_gen: v5e
topology: v5e:2x2
jax: 0.10.0
libtpu: 0.0.40
codegen_flags: <defaults>
</compile_context>

<pallas_src>
import functools

import jax
import jax.numpy as jnp
from jax.experimental import pallas as pl


def _fta_kernel(x_ref, gt_ref, wx_ref, wg_ref, w2_ref, out_ref, *, n, s, c, p, h):
    # x_ref, gt_ref : (n*s, c*p)           native layout, column = ci*p + pi
    # wx_ref, wg_ref: (c*p, h*c*p + c*p)   fused block-diagonal weights
    # w2_ref        : (1, h*c*p)           second key-conv weight, pre-broadcast
    # out_ref       : (n, 2*c*p)           [weighted_sum | weighted_max], col = ci*p + pi
    cp = c * p
    hcp = h * cp

    xf = x_ref[...]
    gf = gt_ref[...]

    # One fused matmul pair == grouped key-conv1 + grouped value-conv for all parts,
    # with the [x, gt + x] concat folded into the weights.
    fused = (jnp.dot(xf, wx_ref[...], preferred_element_type=jnp.float32)
             + jnp.dot(gf, wg_ref[...], preferred_element_type=jnp.float32))  # (n*s, hcp+cp)

    hid = fused[:, :hcp]                           # key hidden, replicated x c
    val = fused[:, hcp:]                           # value, col = ci*p + pi
    hid = jnp.where(hid > 0, hid, 0.01 * hid)      # LeakyReLU(0.01)

    # Second key projection (h -> 1) on the VPU: scale + sum of h contiguous slabs.
    w = hid * w2_ref[...]                          # (n*s, hcp)
    logit = w[:, :cp]
    for j in range(1, h):
        logit = logit + w[:, j * cp:(j + 1) * cp]
    score = jax.nn.sigmoid(logit)                  # (n*s, cp), already broadcast
                                                   # over value channels

    vw = val * score                               # (n*s, cp)

    # Reduce over s per sample (row-split reshape only; lane layout untouched).
    vw3 = vw.reshape(n, s, cp)
    sc3 = score.reshape(n, s, cp)
    vsum = jnp.sum(vw3, axis=1)                    # (n, cp)
    vmax = jnp.max(vw3, axis=1)                    # (n, cp)
    ssum = jnp.sum(sc3, axis=1)                    # (n, cp) per-part sums (replicated)

    inv = pl.reciprocal(ssum, approx=False)        # one reciprocal, two multiplies
    wsum = vsum * inv
    wmax = vmax * (inv * jnp.float32(s))           # /mean(score) == *s/sum(score)

    out_ref[...] = jnp.concatenate([wsum, wmax], axis=-1).astype(out_ref.dtype)


def f_ta_forward(x, gt, w1_t, w2_t, wv_t):
    """x, gt: (n, s, c, p); per-part weights w1_t:(p,2c,h), w2_t:(p,h,1), wv_t:(p,2c,c).
    Returns (p, n, 2c)."""
    n, s, c, p = x.shape
    h = w1_t.shape[-1]
    f32 = jnp.float32

    # Fold the channel concat [x, gt + x] into the weights:
    #   [x | gt + x] @ W = x @ (W[:c] + W[c:]) + gt @ W[c:]
    wx1 = (w1_t[:, :c, :] + w1_t[:, c:, :]).astype(f32)      # (p, c, h)
    wg1 = w1_t[:, c:, :].astype(f32)
    wxv = (wv_t[:, :c, :] + wv_t[:, c:, :]).astype(f32)      # (p, c, c)
    wgv = wv_t[:, c:, :].astype(f32)

    eye = jnp.eye(p, dtype=f32)
    ones_c = jnp.ones((c,), dtype=f32)

    def key_block(wp):
        # (p, c, h) -> (c*p, h*c*p); hidden unit j of part pi lands in columns
        # (j*c + 0..c-1)*p + pi, i.e. pre-replicated c times so the sigmoid gate
        # is already broadcast over the value channels.
        t = jnp.einsum("pcj,r,pq->cpjrq", wp, ones_c, eye)
        return t.reshape(c * p, h * c * p)

    def val_block(wp):
        # (p, c, c) -> (c*p, c*p) strided block-diagonal (col = cj*p + pi).
        t = jnp.einsum("pcd,pq->cpdq", wp, eye)
        return t.reshape(c * p, c * p)

    wx_big = jnp.concatenate([key_block(wx1), val_block(wxv)], axis=1)
    wg_big = jnp.concatenate([key_block(wg1), val_block(wgv)], axis=1)
    w2_row = jnp.einsum("pj,r->jrp", w2_t[:, :, 0].astype(f32),
                        ones_c).reshape(1, h * c * p)

    # Free reshapes of the native (n, s, c, p) layout -> no HBM cat / transpose.
    x2d = x.reshape(n * s, c * p)
    gt2d = gt.reshape(n * s, c * p)

    out2d = pl.pallas_call(
        functools.partial(_fta_kernel, n=n, s=s, c=c, p=p, h=h),
        out_shape=jax.ShapeDtypeStruct((n, 2 * c * p), jnp.float32),
    )(x2d, gt2d, wx_big, wg_big, w2_row)

    # (n, [wsum | max], c, p) -> (p, n, 2c); tiny (p*n*2c elements) rearrange.
    out = out2d.reshape(n, 2, c, p)
    out = jnp.transpose(out, (3, 0, 1, 2)).reshape(p, n, 2 * c)
    return out


def f_ta_reference(x, gt, w1_t, w2_t, wv_t):
    """Pure-JAX reference matching the PyTorch forward exactly."""
    n, s, c, p = x.shape
    cat = jnp.concatenate([x, gt + x], axis=2)                # (n, s, 2c, p)
    f = jnp.transpose(cat, (0, 3, 1, 2))                      # (n, p, s, 2c)
    hh = jnp.einsum("npsd,pdh->npsh", f, w1_t)
    hh = jnp.where(hh > 0, hh, 0.01 * hh)
    score = jax.nn.sigmoid(jnp.einsum("npsh,pho->npso", hh, w2_t))  # (n,p,s,1)
    v = jnp.einsum("npsd,pdc->npsc", f, wv_t)                 # (n, p, s, c)
    vw = v * score
    ssum = jnp.sum(score, axis=2)                             # (n, p, 1)
    wsum = jnp.sum(vw, axis=2) / ssum                         # (n, p, c)
    mx = jnp.max(vw, axis=2) / (ssum / s)                     # (n, p, c)
    out = jnp.concatenate([wsum, mx], axis=2)                 # (n, p, 2c)
    return jnp.transpose(out, (1, 0, 2))                      # (p, n, 2c)


if __name__ == "__main__":
    # small shapes consistent with the module:
    #   in_planes c = 16, part_num p = 4, batch n = 2, seq s = 8
    n, s, c, p = 2, 8, 16, 4
    # grouped key conv: in = 2*c*p, hidden = (2*c*p)//16, per-part hidden:
    h_per = ((2 * c * p) // 16) // p                          # = 2

    key = jax.random.PRNGKey(0)
    kx, kg, k1, k2, k3 = jax.random.split(key, 5)

    x = jax.random.normal(kx, (n, s, c, p), dtype=jnp.float32)
    gt = jax.random.normal(kg, (n, s, c, p), dtype=jnp.float32)

    # Deterministic synthetic per-part grouped-conv weights (bias=False), stored
    # pre-transposed for "feature @ weight" matmuls.
    w1_t = 0.1 * jax.random.normal(k1, (p, 2 * c, h_per), dtype=jnp.float32)
    w2_t = 0.1 * jax.random.normal(k2, (p, h_per, 1), dtype=jnp.float32)
    wv_t = 0.1 * jax.random.normal(k3, (p, 2 * c, c), dtype=jnp.float32)

    out = f_ta_forward(x, gt, w1_t, w2_t, wv_t)
    out = jax.block_until_ready(out)

    ref = f_ta_reference(x, gt, w1_t, w2_t, wv_t)
    assert out.shape == (p, n, 2 * c), out.shape
    assert jnp.allclose(out, ref, rtol=1e-3, atol=1e-3), (
        float(jnp.max(jnp.abs(out - ref))))

    print("KERNEL_OK")
</pallas_src>

<mosaic_0001>
module attributes {stable_mosaic.version = 11 : i64} {
  func.func @_fta_kernel(%arg0: memref<16x64xf32, #tpu.memory_space<vmem>>, %arg1: memref<16x64xf32, #tpu.memory_space<vmem>>, %arg2: memref<64x192xf32, #tpu.memory_space<vmem>>, %arg3: memref<64x192xf32, #tpu.memory_space<vmem>>, %arg4: memref<1x128xf32, #tpu.memory_space<vmem>>, %arg5: memref<2x128xf32, #tpu.memory_space<vmem>>) attributes {dimension_semantics = [], scalar_prefetch = 0 : i64, scratch_operands = 0 : i64, tpu.core_type = #tpu.core_type<tc>} {
    %c0 = arith.constant 0 : index
    %c0_0 = arith.constant 0 : index
    %0 = vector.load %arg0[%c0, %c0_0] : memref<16x64xf32, #tpu.memory_space<vmem>>, vector<16x64xf32>
    %c0_1 = arith.constant 0 : index
    %c0_2 = arith.constant 0 : index
    %1 = vector.load %arg1[%c0_1, %c0_2] : memref<16x64xf32, #tpu.memory_space<vmem>>, vector<16x64xf32>
    %c0_3 = arith.constant 0 : index
    %c0_4 = arith.constant 0 : index
    %2 = vector.load %arg2[%c0_3, %c0_4] : memref<64x192xf32, #tpu.memory_space<vmem>>, vector<64x192xf32>
    %cst = arith.constant dense<0.000000e+00> : vector<16x192xf32>
    %3 = tpu.matmul %0, %2, %cst {dimension_numbers = #tpu.dot_dimension_numbers<[1], [0], [0], [1], [0, 0, 1, 1], [], []>} : vector<16x64xf32>, vector<64x192xf32>, vector<16x192xf32> -> vector<16x192xf32>
    %c0_5 = arith.constant 0 : index
    %c0_6 = arith.constant 0 : index
    %4 = vector.load %arg3[%c0_5, %c0_6] : memref<64x192xf32, #tpu.memory_space<vmem>>, vector<64x192xf32>
    %cst_7 = arith.constant dense<0.000000e+00> : vector<16x192xf32>
    %5 = tpu.matmul %1, %4, %cst_7 {dimension_numbers = #tpu.dot_dimension_numbers<[1], [0], [0], [1], [0, 0, 1, 1], [], []>} : vector<16x64xf32>, vector<64x192xf32>, vector<16x192xf32> -> vector<16x192xf32>
    %6 = arith.addf %3, %5 : vector<16x192xf32>
    %7 = vector.extract_strided_slice %6 {offsets = [0, 0], sizes = [16, 128], strides = [1, 1]} : vector<16x192xf32> to vector<16x128xf32>
    %8 = vector.extract_strided_slice %6 {offsets = [0, 128], sizes = [16, 64], strides = [1, 1]} : vector<16x192xf32> to vector<16x64xf32>
    %cst_8 = arith.constant 0.000000e+00 : f32
    %9 = vector.broadcast %cst_8 : f32 to vector<16x128xf32>
    %10 = arith.cmpf ogt, %7, %9 : vector<16x128xf32>
    %cst_9 = arith.constant 0.00999999977 : f32
    %11 = vector.broadcast %cst_9 : f32 to vector<16x128xf32>
    %12 = arith.mulf %11, %7 : vector<16x128xf32>
    %13 = arith.select %10, %7, %12 : vector<16x128xi1>, vector<16x128xf32>
    %c0_10 = arith.constant 0 : index
    %c0_11 = arith.constant 0 : index
    %14 = vector.load %arg4[%c0_10, %c0_11] : memref<1x128xf32, #tpu.memory_space<vmem>>, vector<1x128xf32>
    %15 = vector.broadcast %14 : vector<1x128xf32> to vector<16x128xf32>
    %16 = arith.mulf %13, %15 : vector<16x128xf32>
    %17 = vector.extract_strided_slice %16 {offsets = [0, 0], sizes = [16, 64], strides = [1, 1]} : vector<16x128xf32> to vector<16x64xf32>
    %18 = vector.extract_strided_slice %16 {offsets = [0, 64], sizes = [16, 64], strides = [1, 1]} : vector<16x128xf32> to vector<16x64xf32>
    %19 = arith.addf %17, %18 : vector<16x64xf32>
    %20 = arith.negf %19 : vector<16x64xf32>
    %21 = math.exp %20 : vector<16x64xf32>
    %cst_12 = arith.constant 1.000000e+00 : f32
    %22 = vector.broadcast %cst_12 : f32 to vector<16x64xf32>
    %23 = arith.addf %22, %21 : vector<16x64xf32>
    %24 = arith.divf %22, %23 : vector<16x64xf32>
    %25 = arith.mulf %8, %24 : vector<16x64xf32>
    %26 = vector.shape_cast %25 : vector<16x64xf32> to vector<2x8x64xf32>
    %27 = vector.shape_cast %24 : vector<16x64xf32> to vector<2x8x64xf32>
    %cst_13 = arith.constant dense<0.000000e+00> : vector<2x64xf32>
    %28 = vector.multi_reduction <add>, %26, %cst_13 [1] : vector<2x8x64xf32> to vector<2x64xf32>
    %cst_14 = arith.constant dense<0xFF800000> : vector<2x64xf32>
    %29 = vector.multi_reduction <maximumf>, %26, %cst_14 [1] : vector<2x8x64xf32> to vector<2x64xf32>
    %cst_15 = arith.constant dense<0.000000e+00> : vector<2x64xf32>
    %30 = vector.multi_reduction <add>, %27, %cst_15 [1] : vector<2x8x64xf32> to vector<2x64xf32>
    %31 = tpu.reciprocal %30 : vector<2x64xf32> -> vector<2x64xf32>
    %32 = arith.mulf %28, %31 : vector<2x64xf32>
    %cst_16 = arith.constant 8.000000e+00 : f32
    %33 = vector.broadcast %cst_16 : f32 to vector<2x64xf32>
    %34 = arith.mulf %31, %33 : vector<2x64xf32>
    %35 = arith.mulf %29, %34 : vector<2x64xf32>
    %36 = tpu.concatenate %32, %35 in 1 : vector<2x64xf32>, vector<2x64xf32> -> vector<2x128xf32>
    %c0_17 = arith.constant 0 : index
    %c0_18 = arith.constant 0 : index
    %37 = vector.load %arg5[%c0_17, %c0_18] : memref<2x128xf32, #tpu.memory_space<vmem>>, vector<2x128xf32>
    tpu.vector_store %arg5[%c0_17, %c0_18], %36 {strides = array<i32>} : memref<2x128xf32, #tpu.memory_space<vmem>>, vector<2x128xf32>,
    return
  }
}

</mosaic_0001>

<llo_original>
// kernel: tpu_custom_call.1
$region0: #{tpu_custom_call.1}
  #allocation0 [shape = 'u32[]', space=smem, size = 0x4, offset = 0x4, fixed_abs, tag = 'smem constant byte address 0x4 - core index']
  #allocation1 [shape = 'u32[72,128]{1,0:T(1,128)}', space=vmem, size = 0x9000, scoped, tag = 'internal scratch']
  %s0 = inlined_call_operand.hbm [shape: f32[16,64], index: 0, kind: input, shape index: {}]
  %s1 = inlined_call_operand.hbm [shape: f32[16,64], index: 1, kind: input, shape index: {}]
  %s2 = inlined_call_operand.hbm [shape: f32[64,192], index: 2, kind: input, shape index: {}]
  %s3 = inlined_call_operand.hbm [shape: f32[64,192], index: 3, kind: input, shape index: {}]
  %s4 = inlined_call_operand.vmem [shape: f32[1,128], index: 4, kind: input, shape index: {}]
  %s5 = inlined_call_operand.hbm [shape: f32[2,128], index: 5, kind: output, shape index: {}]
  %s6 = sld [smem:[#allocation0]]
  $region46: #{tpu_custom_call.1} parent=0
    _
  %s8 = ssub.s32 1, %s6
  %s9 = scalar_select 0, %s8, %s6
  $region1: #{tpu_custom_call.1} parent=0
    #allocation2 [shape = 'u8[8192]{0}', space=vmem, size = 0x2000, scoped, tag = 'input window, operand 0, single buffered']
    #allocation3 [shape = 's32[1]{0}', space=sflag, size = 0x4, scoped, tag = 'scoped memory for tpu_custom_call.1']
    #allocation4 [shape = 's32[1]{0}', space=sflag, size = 0x4, scoped, tag = 'scoped memory for tpu_custom_call.1']
    #allocation5 [shape = 'u8[8192]{0}', space=vmem, size = 0x2000, scoped, tag = 'input window, operand 1, single buffered']
    #allocation6 [shape = 's32[1]{0}', space=sflag, size = 0x4, scoped, tag = 'scoped memory for tpu_custom_call.1']
    #allocation7 [shape = 'u8[65536]{0}', space=vmem, size = 0x10000, scoped, tag = 'input window, operand 2, single buffered']
    #allocation8 [shape = 'u8[65536]{0}', space=vmem, size = 0x10000, scoped, tag = 'input window, operand 3, single buffered']
    #allocation9 [shape = 's32[1]{0}', space=sflag, size = 0x4, scoped, tag = 'scoped memory for tpu_custom_call.1']
    #allocation10 [shape = 'u8[1024]{0}', space=vmem, size = 0x400, scoped, tag = 'output window, operand 0, single buffered']
    %10 = vsyncpa [#allocation3], 0
    %11 = vsyncpa [#allocation6], 0
    %12 = vsyncpa [#allocation9], 0
    %13 = vsyncpa [#allocation4], 0
    // Predicated region
    $region2: #{tpu_custom_call.1} parent=1 // pred_check
      _
    $region3: #{tpu_custom_call.1} parent=1 // pred_check_branch
      %15 = sbr.rel (0) target = $region5
    $region4: #{tpu_custom_call.1} parent=1 // pred_region
      %17 = vsyncadd [#allocation3], 0
      %s18 = sshll.u32 %s0, 4
      %s19 = int_to_ptr.hbm [resolvable:$true] %s18
      %s20 = sshll.u32 [#allocation2], 4
      %s21 = int_to_ptr.vmem [resolvable:$true] %s20
      %26 = dma.hbm_to_vmem [thread:$0]  %s19, 256, %s21, [#allocation3], 128, 128, 8
    $region5: #{tpu_custom_call.1} parent=1 // pred_fallthru
      _
    // Predicated region
    $region6: #{tpu_custom_call.1} parent=1 // pred_check
      _
    $region7: #{tpu_custom_call.1} parent=1 // pred_check_branch
      %28 = sbr.rel (0) target = $region9
    $region8: #{tpu_custom_call.1} parent=1 // pred_region
      %30 = vsyncadd [#allocation6], 0
      %s31 = sshll.u32 %s1, 4
      %s32 = int_to_ptr.hbm [resolvable:$true] %s31
      %s33 = sshll.u32 [#allocation5], 4
      %s34 = int_to_ptr.vmem [resolvable:$true] %s33
      %39 = dma.hbm_to_vmem [thread:$0]  %s32, 256, %s34, [#allocation6], 128, 128, 8
    $region9: #{tpu_custom_call.1} parent=1 // pred_fallthru
      _
    // Predicated region
    $region10: #{tpu_custom_call.1} parent=1 // pred_check
      _
    $region11: #{tpu_custom_call.1} parent=1 // pred_check_branch
      %41 = sbr.rel (0) target = $region13
    $region12: #{tpu_custom_call.1} parent=1 // pred_region
      %43 = vsyncadd [#allocation6], 0
      %s44 = sshll.u32 %s2, 4
      %s45 = int_to_ptr.hbm [resolvable:$true] %s44
      %s46 = sshll.u32 [#allocation7], 4
      %s47 = int_to_ptr.vmem [resolvable:$true] %s46
      %52 = dma.hbm_to_vmem [thread:$0]  %s45, 2048, %s47, [#allocation6], 256, 256, 16
    $region13: #{tpu_custom_call.1} parent=1 // pred_fallthru
      _
    // Predicated region
    $region14: #{tpu_custom_call.1} parent=1 // pred_check
      _
    $region15: #{tpu_custom_call.1} parent=1 // pred_check_branch
      %54 = sbr.rel (0) target = $region17
    $region16: #{tpu_custom_call.1} parent=1 // pred_region
      %56 = vsyncadd [#allocation9], 0
      %s57 = sshll.u32 %s3, 4
      %s58 = int_to_ptr.hbm [resolvable:$true] %s57
      %s59 = sshll.u32 [#allocation8], 4
      %s60 = int_to_ptr.vmem [resolvable:$true] %s59
      %65 = dma.hbm_to_vmem [thread:$0]  %s58, 2048, %s60, [#allocation9], 256, 256, 16
    $region17: #{tpu_custom_call.1} parent=1 // pred_fallthru
      _
    // Predicated region
    $region18: #{tpu_custom_call.1} parent=1 // pred_check
      _
    $region19: #{tpu_custom_call.1} parent=1 // pred_check_branch
      %67 = sbr.rel (0) target = $region21
    $region20: #{tpu_custom_call.1} parent=1 // pred_region
      _
    $region21: #{tpu_custom_call.1} parent=1 // pred_fallthru
      _
    // Predicated region
    $region22: #{tpu_custom_call.1} parent=1 // pred_check
      _
    $region23: #{tpu_custom_call.1} parent=1 // pred_check_branch
      %69 = sbr.rel (0) target = $region25
    $region24: #{tpu_custom_call.1} parent=1 // pred_region
      %71 = dma.done [#allocation3], 256
    $region25: #{tpu_custom_call.1} parent=1 // pred_fallthru
      _
    // Predicated region
    $region26: #{tpu_custom_call.1} parent=1 // pred_check
      _
    $region27: #{tpu_custom_call.1} parent=1 // pred_check_branch
      %73 = sbr.rel (0) target = $region29
    $region28: #{tpu_custom_call.1} parent=1 // pred_region
      %75 = dma.done [#allocation6], 256
    $region29: #{tpu_custom_call.1} parent=1 // pred_fallthru
      _
    // Predicated region
    $region30: #{tpu_custom_call.1} parent=1 // pred_check
      _
    $region31: #{tpu_custom_call.1} parent=1 // pred_check_branch
      %77 = sbr.rel (0) target = $region33
    $region32: #{tpu_custom_call.1} parent=1 // pred_region
      %79 = dma.done [#allocation6], 2048
    $region33: #{tpu_custom_call.1} parent=1 // pred_fallthru
      _
    // Predicated region
    $region34: #{tpu_custom_call.1} parent=1 // pred_check
      _
    $region35: #{tpu_custom_call.1} parent=1 // pred_check_branch
      %81 = sbr.rel (0) target = $region37
    $region36: #{tpu_custom_call.1} parent=1 // pred_region
      %83 = dma.done [#allocation9], 2048
    $region37: #{tpu_custom_call.1} parent=1 // pred_fallthru
      _
    %v84 = vld [vmem:[#allocation2] sm:$0xff]
    %v85 = vld [vmem:[#allocation2 + $0x8] sm:$0xff]
    %v86 = vld [vmem:[#allocation5] sm:$0xff]
    %v87 = vld [vmem:[#allocation5 + $0x8] sm:$0xff]
    %v88 = vld [vmem:[#allocation7] sm:$0xff]
    %v89 = vld [vmem:[#allocation7 + $0x8] sm:$0xff]
    %v90 = vld [vmem:[#allocation7 + $0x10] sm:$0xff]
    %v91 = vld [vmem:[#allocation7 + $0x18] sm:$0xff]
    %v92 = vld [vmem:[#allocation7 + $0x20] sm:$0xff]
    %v93 = vld [vmem:[#allocation7 + $0x28] sm:$0xff]
    %v94 = vld [vmem:[#allocation7 + $0x30] sm:$0xff]
    %v95 = vld [vmem:[#allocation7 + $0x38] sm:$0xff]
    %v96 = vld [vmem:[#allocation7 + $0x40] sm:$0xff]
    %v97 = vld [vmem:[#allocation7 + $0x48] sm:$0xff]
    %v98 = vld [vmem:[#allocation7 + $0x50] sm:$0xff]
    %v99 = vld [vmem:[#allocation7 + $0x58] sm:$0xff]
    %v100 = vld [vmem:[#allocation7 + $0x60] sm:$0xff]
    %v101 = vld [vmem:[#allocation7 + $0x68] sm:$0xff]
    %v102 = vld [vmem:[#allocation7 + $0x70] sm:$0xff]
    %v103 = vld [vmem:[#allocation7 + $0x78] sm:$0xff]
    %v104 = vld [vmem:[#allocation8] sm:$0xff]
    %v105 = vld [vmem:[#allocation8 + $0x8] sm:$0xff]
    %v106 = vld [vmem:[#allocation8 + $0x10] sm:$0xff]
    %v107 = vld [vmem:[#allocation8 + $0x18] sm:$0xff]
    %v108 = vld [vmem:[#allocation8 + $0x20] sm:$0xff]
    %v109 = vld [vmem:[#allocation8 + $0x28] sm:$0xff]
    %v110 = vld [vmem:[#allocation8 + $0x30] sm:$0xff]
    %v111 = vld [vmem:[#allocation8 + $0x38] sm:$0xff]
    %v112 = vld [vmem:[#allocation8 + $0x40] sm:$0xff]
    %v113 = vld [vmem:[#allocation8 + $0x48] sm:$0xff]
    %v114 = vld [vmem:[#allocation8 + $0x50] sm:$0xff]
    %v115 = vld [vmem:[#allocation8 + $0x58] sm:$0xff]
    %v116 = vld [vmem:[#allocation8 + $0x60] sm:$0xff]
    %v117 = vld [vmem:[#allocation8 + $0x68] sm:$0xff]
    %v118 = vld [vmem:[#allocation8 + $0x70] sm:$0xff]
    %v119 = vld [vmem:[#allocation8 + $0x78] sm:$0xff]
    %vm120 = vcmask 523264
    %v122 = vsel %vm120, %v86, 0
    %v125 = vsel %vm120, %v87, 0
    %127 = vmatpush.msra.mxu0 0.0
    %128 = vmatpush.msra.mxu0 0.0
    %129 = vmatpush.msra.mxu0 0.0
    %130 = vmatpush.msra.mxu0 0.0
    %131 = vmatpush.msra.mxu0 0.0
    %132 = vmatpush.msra.mxu0 0.0
    %133 = vmatpush.msra.mxu0 0.0
    %134 = vmatpush.msra.mxu0 0.0
    %135 = vmatpush.msra.mxu0 %v118
    %136 = vmatpush.msra.mxu0 %v116
    %137 = vmatpush.msra.mxu0 %v114
    %138 = vmatpush.msra.mxu0 %v112
    %139 = vmatpush.msra.mxu0 %v110
    %140 = vmatpush.msra.mxu0 %v108
    %141 = vmatpush.msra.mxu0 %v106
    %142 = vmatpush.msra.mxu0 %v104
    %143 = vmatmul.f32.gmra.mxu0 %v122
    %v144 = vpop.f32.mrf.mxu0
    %v145 = vadd.f32 0.0, %v144
    %146 = vmatmul.f32.gmra.mxu0 %v125
    %v147 = vpop.f32.mrf.mxu0
    %v148 = vadd.f32 0.0, %v147
    %149 = vdwg.mxu0
    %150 = vmatpush.msra.mxu0 0.0
    %151 = vmatpush.msra.mxu0 0.0
    %152 = vmatpush.msra.mxu0 0.0
    %153 = vmatpush.msra.mxu0 0.0
    %154 = vmatpush.msra.mxu0 0.0
    %155 = vmatpush.msra.mxu0 0.0
    %156 = vmatpush.msra.mxu0 0.0
    %157 = vmatpush.msra.mxu0 0.0
    %158 = vmatpush.msra.mxu0 %v119
    %159 = vmatpush.msra.mxu0 %v117
    %160 = vmatpush.msra.mxu0 %v115
    %161 = vmatpush.msra.mxu0 %v113
    %162 = vmatpush.msra.mxu0 %v111
    %163 = vmatpush.msra.mxu0 %v109
    %164 = vmatpush.msra.mxu0 %v107
    %165 = vmatpush.msra.mxu0 %v105
    %166 = vmatmul.f32.gmra.mxu0 %v122
    %v167 = vpop.f32.mrf.mxu0
    %v168 = vadd.f32 0.0, %v167
    %169 = vmatmul.f32.gmra.mxu0 %v125
    %v170 = vpop.f32.mrf.mxu0
    %v171 = vadd.f32 0.0, %v170
    %172 = vdwg.mxu0
    %v174 = vsel %vm120, %v84, 0
    %v177 = vsel %vm120, %v85, 0
    %179 = vmatpush.msra.mxu0 0.0
    %180 = vmatpush.msra.mxu0 0.0
    %181 = vmatpush.msra.mxu0 0.0
    %182 = vmatpush.msra.mxu0 0.0
    %183 = vmatpush.msra.mxu0 0.0
    %184 = vmatpush.msra.mxu0 0.0
    %185 = vmatpush.msra.mxu0 0.0
    %186 = vmatpush.msra.mxu0 0.0
    %187 = vmatpush.msra.mxu0 %v102
    %188 = vmatpush.msra.mxu0 %v100
    %189 = vmatpush.msra.mxu0 %v98
    %190 = vmatpush.msra.mxu0 %v96
    %191 = vmatpush.msra.mxu0 %v94
    %192 = vmatpush.msra.mxu0 %v92
    %193 = vmatpush.msra.mxu0 %v90
    %194 = vmatpush.msra.mxu0 %v88
    %195 = vmatmul.f32.gmra.mxu0 %v174
    %v196 = vpop.f32.mrf.mxu0
    %v197 = vadd.f32 %v145, %v196
    %198 = vmatmul.f32.gmra.mxu0 %v177
    %v199 = vpop.f32.mrf.mxu0
    %v200 = vadd.f32 %v148, %v199
    %201 = vdwg.mxu0
    %202 = vmatpush.msra.mxu0 0.0
    %203 = vmatpush.msra.mxu0 0.0
    %204 = vmatpush.msra.mxu0 0.0
    %205 = vmatpush.msra.mxu0 0.0
    %206 = vmatpush.msra.mxu0 0.0
    %207 = vmatpush.msra.mxu0 0.0
    %208 = vmatpush.msra.mxu0 0.0
    %209 = vmatpush.msra.mxu0 0.0
    %210 = vmatpush.msra.mxu0 %v103
    %211 = vmatpush.msra.mxu0 %v101
    %212 = vmatpush.msra.mxu0 %v99
    %213 = vmatpush.msra.mxu0 %v97
    %214 = vmatpush.msra.mxu0 %v95
    %215 = vmatpush.msra.mxu0 %v93
    %216 = vmatpush.msra.mxu0 %v91
    %217 = vmatpush.msra.mxu0 %v89
    %218 = vmatmul.f32.gmra.mxu0 %v174
    %v219 = vpop.f32.mrf.mxu0
    %v220 = vadd.f32 %v168, %v219
    %221 = vmatmul.f32.gmra.mxu0 %v177
    %v222 = vpop.f32.mrf.mxu0
    %v223 = vadd.f32 %v171, %v222
    %224 = vdwg.mxu0
    %vm225 = vcmp.gt.f32.partialorder %v197, 0.0
    %vm226 = vcmp.gt.f32.partialorder %v200, 0.0
    %v227 = vmul.f32 %v197, 0.01
    %v228 = vmul.f32 %v200, 0.01
    %v229 = vsel %vm225, %v197, %v227
    %v230 = vsel %vm226, %v200, %v228
    %v231 = vld [vmem:[%s4] sm:$0x1]
    %v233 = vperm.slane %v231, 0
    %v235 = vmul.f32 %v229, %v233
    %v236 = vmul.f32 %v230, %v233
    %239 = vrot.lane.b32.xlu0 %v235, 64
    %v240 = vpop.permute.xlu0 %239
    %241 = vrot.lane.b32.xlu0 %v236, 64
    %v242 = vpop.permute.xlu0 %241
    %v245 = vadd.f32 %v235, %v240
    %v246 = vadd.f32 %v236, %v242
    %v247 = vxor.u32 %v245, 2147483648
    %v248 = vxor.u32 %v246, 2147483648
    %v249 = vmul.f32 %v247, 1.442695
    %v250 = vpow.pop %v249
    %v251 = vmul.f32 %v248, 1.442695
    %v252 = vpow.pop %v251
    %v253 = vadd.f32 %v250, 1.0
    %v254 = vadd.f32 %v252, 1.0
    %v255 = vrcp.pop %v253
    %v256 = vmul.f32 %v253, %v255
    %v257 = vsub.f32 1.0, %v256
    %v258 = vmul.f32 %v255, %v257
    %v259 = vadd.f32 %v255, %v258
    %vm260 = vweird.f32 %v253
    %vm261 = vweird.f32 %v255
    %vm262 = vmor %vm260, %vm261
    %v263 = vsel %vm262, %v255, %v259
    %v264 = vand.u32 2147483647, %v253
    %vm265 = vcmp.eq.f32.partialorder %v264, 8.507059e+37
    %v266 = vand.u32 %v253, 2147483648
    %v267 = vor.u32 1.1754944e-38, %v266
    %v268 = vsel %vm265, %v267, %v263
    %v269 = vmul.f32 1.0, %v268
    %v270 = vrcp.pop %v254
    %v271 = vmul.f32 %v254, %v270
    %v272 = vsub.f32 1.0, %v271
    %v273 = vmul.f32 %v270, %v272
    %v274 = vadd.f32 %v270, %v273
    %vm275 = vweird.f32 %v254
    %vm276 = vweird.f32 %v270
    %vm277 = vmor %vm275, %vm276
    %v278 = vsel %vm277, %v270, %v274
    %v279 = vand.u32 2147483647, %v254
    %vm280 = vcmp.eq.f32.partialorder %v279, 8.507059e+37
    %v281 = vand.u32 %v254, 2147483648
    %v282 = vor.u32 1.1754944e-38, %v281
    %v283 = vsel %vm280, %v282, %v278
    %v284 = vmul.f32 1.0, %v283
    %v285 = vmul.f32 %v220, %v269
    %v286 = vmul.f32 %v223, %v284
    %v287 = vsel %vm120, %v285, 0.0
    %v288 = vrot.slane %v287, 4
    %v289 = vadd.f32 %v287, %v288
    %v290 = vrot.slane %v289, 2
    %v291 = vadd.f32 %v289, %v290
    %v292 = vrot.slane %v291, 1
    %v293 = vadd.f32 %v291, %v292
    %v294 = vsel %vm120, %v286, 0.0
    %v295 = vrot.slane %v294, 4
    %v296 = vadd.f32 %v294, %v295
    %v297 = vrot.slane %v296, 2
    %v298 = vadd.f32 %v296, %v297
    %v299 = vrot.slane %v298, 1
    %v300 = vadd.f32 %v298, %v299
    %v301 = vsel %vm120, %v285, -inf
    %v302 = vrot.slane %v301, 4
    %v303 = vmax.f32 %v301, %v302
    %v304 = vrot.slane %v303, 2
    %v305 = vmax.f32 %v303, %v304
    %v306 = vrot.slane %v305, 1
    %v307 = vmax.f32 %v305, %v306
    %v308 = vsel %vm120, %v286, -inf
    %v309 = vrot.slane %v308, 4
    %v310 = vmax.f32 %v308, %v309
    %v311 = vrot.slane %v310, 2
    %v312 = vmax.f32 %v310, %v311
    %v313 = vrot.slane %v312, 1
    %v314 = vmax.f32 %v312, %v313
    %v315 = vsel %vm120, %v269, 0.0
    %v316 = vrot.slane %v315, 4
    %v317 = vadd.f32 %v315, %v316
    %v318 = vrot.slane %v317, 2
    %v319 = vadd.f32 %v317, %v318
    %v320 = vrot.slane %v319, 1
    %v321 = vadd.f32 %v319, %v320
    %v322 = vsel %vm120, %v284, 0.0
    %v323 = vrot.slane %v322, 4
    %v324 = vadd.f32 %v322, %v323
    %v325 = vrot.slane %v324, 2
    %v326 = vadd.f32 %v324, %v325
    %v327 = vrot.slane %v326, 1
    %v328 = vadd.f32 %v326, %v327
    %v329 = vrcp.pop %v321
    %v330 = vmul.f32 %v321, %v329
    %v331 = vsub.f32 1.0, %v330
    %v332 = vmul.f32 %v329, %v331
    %v333 = vadd.f32 %v329, %v332
    %vm334 = vweird.f32 %v321
    %vm335 = vweird.f32 %v329
    %vm336 = vmor %vm334, %vm335
    %v337 = vsel %vm336, %v329, %v333
    %v338 = vand.u32 2147483647, %v321
    %vm339 = vcmp.eq.f32.partialorder %v338, 8.507059e+37
    %v340 = vand.u32 %v321, 2147483648
    %v341 = vor.u32 1.1754944e-38, %v340
    %v342 = vsel %vm339, %v341, %v337
    %v343 = vrcp.pop %v328
    %v344 = vmul.f32 %v328, %v343
    %v345 = vsub.f32 1.0, %v344
    %v346 = vmul.f32 %v343, %v345
    %v347 = vadd.f32 %v343, %v346
    %vm348 = vweird.f32 %v328
    %vm349 = vweird.f32 %v343
    %vm350 = vmor %vm348, %vm349
    %v351 = vsel %vm350, %v343, %v347
    %v352 = vand.u32 2147483647, %v328
    %vm353 = vcmp.eq.f32.partialorder %v352, 8.507059e+37
    %v354 = vand.u32 %v328, 2147483648
    %v355 = vor.u32 1.1754944e-38, %v354
    %v356 = vsel %vm353, %v355, %v351
    %v357 = vmul.f32 %v293, %v342
    %v358 = vmul.f32 %v300, %v356
    %v359 = vmul.f32 %v342, 8.0
    %v360 = vmul.f32 %v356, 8.0
    %v361 = vmul.f32 %v307, %v359
    %v362 = vmul.f32 %v314, %v360
    %vm365 = vcmask 1041409
    %v366 = vsel %vm365, %v358, %v357
    %v370 = vsel %vm365, %v362, %v361
    %371 = vrot.lane.b32.xlu0 %v370, 64
    %v372 = vpop.permute.xlu0 %371
    %v374 = vsel %vm120, %v366, %v372
    %375 = vst [vmem:[#allocation10] sm:$0x3] %v374
    // Predicated region
    $region38: #{tpu_custom_call.1} parent=1 // pred_check
      _
    $region39: #{tpu_custom_call.1} parent=1 // pred_check_branch
      %377 = sbr.rel (0) target = $region41
    $region40: #{tpu_custom_call.1} parent=1 // pred_region
      %379 = vsyncadd [#allocation4], 0
      %s381 = sshll.u32 [#allocation10], 4
      %s382 = int_to_ptr.vmem [resolvable:$true] %s381
      %s383 = sshll.u32 %s5, 4
      %s384 = int_to_ptr.hbm [resolvable:$true] %s383
      %386 = dma.vmem_to_hbm [thread:$0]  %s382, 32, %s384, [#allocation4]
    $region41: #{tpu_custom_call.1} parent=1 // pred_fallthru
      _
    // Predicated region
    $region42: #{tpu_custom_call.1} parent=1 // pred_check
      _
    $region43: #{tpu_custom_call.1} parent=1 // pred_check_branch
      %388 = sbr.rel (0) target = $region45
    $region44: #{tpu_custom_call.1} parent=1 // pred_region
      %390 = dma.done [#allocation4], 32
    $region45: #{tpu_custom_call.1} parent=1 // pred_fallthru
      _
    %391 = vsyncpa [#allocation3], 1
    %392 = vsyncpa [#allocation6], 1
    %393 = vsyncpa [#allocation9], 1
    %394 = vsyncpa [#allocation4], 1

</llo_original>
